<compile_context>
chip_gen: v6e
topology: v6e:2x2x1
jax: 0.10.0
libtpu: 0.0.40
codegen_flags: <defaults>
</compile_context>

<pallas_src>
import jax
import jax.numpy as jnp
from jax import lax
from jax.experimental import pallas as pl
from jax.experimental.pallas import tpu as pltpu

LANE = 128
SUBLANE = 8


def _round_up(x, m):
    return ((x + m - 1) // m) * m


# --------------------------- Kernel 1: sigmoid --------------------------------
def _sigmoid_kernel(x_ref, o_ref):
    x = x_ref[...].astype(jnp.float32)
    # exp on the EUP, approx reciprocal also on the EUP (frees VALU bundles).
    s = pl.reciprocal(1.0 + jnp.exp(-x), approx=True)
    o_ref[...] = s.astype(o_ref.dtype)


def _sigmoid_pallas(x, out_dtype=jnp.bfloat16):
    """Elementwise sigmoid over an arbitrary array, laid out lane-dense."""
    size = x.size
    padded = _round_up(size, SUBLANE * LANE)
    rows = padded // LANE
    x2d = jnp.pad(x.reshape(-1), (0, padded - size)).reshape(rows, LANE)
    y2d = pl.pallas_call(
        _sigmoid_kernel,
        out_shape=jax.ShapeDtypeStruct((rows, LANE), out_dtype),
        grid=(1,),
        in_specs=[pl.BlockSpec((rows, LANE), lambda i: (0, 0))],
        out_specs=pl.BlockSpec((rows, LANE), lambda i: (0, 0)),
    )(x2d)
    return y2d.reshape(-1)[:size].reshape(x.shape)


# ------------------- Kernel 2: conv-as-matmul + bias + ReLU -------------------
def _matmul_bias_relu_kernel(p_ref, w_ref, b_ref, o_ref):
    # p_ref: (TM, Kp) bf16   w_ref: (Kp, Coutp) bf16   b_ref: (1, Coutp) f32
    acc = jnp.dot(p_ref[...], w_ref[...],
                  preferred_element_type=jnp.float32)        # MXU, f32 acc
    o_ref[...] = jnp.maximum(acc + b_ref[...], 0.0).astype(o_ref.dtype)


def network_forward(x_nchw, w_hwio, b, *, pad=1, tile_m=128):
    N, Cin, H, W = x_nchw.shape
    KH, KW, Cin_w, Cout = w_hwio.shape
    assert Cin == Cin_w
    Hout = H + 2 * pad - KH + 1
    Wout = W + 2 * pad - KW + 1
    P = Hout * Wout
    K = KH * KW * Cin

    # Lane-dense / MXU-friendly padded sizes.
    Kp = _round_up(K, LANE)            # 196 -> 256
    Coutp = _round_up(Cout, LANE)      # 64  -> 128
    M = N * P                          # 2*144 = 288
    Mp = _round_up(M, tile_m)          # 384 (3 parallel grid steps)

    # 1) sigmoid on the compact input (Pallas), bf16 output for the MXU path.
    s = _sigmoid_pallas(x_nchw, out_dtype=jnp.bfloat16)

    # 2) glue: NCHW -> NHWC, zero-pad (PyTorch zero-pads AFTER sigmoid).
    s = jnp.transpose(s, (0, 2, 3, 1))
    sp = jnp.pad(s, ((0, 0), (pad, pad), (pad, pad), (0, 0)))

    # 3) im2col -> (Mp, Kp) bf16 patches (zero pad rows/cols; padded weight
    #    rows are zero so the pad values never contribute).
    cols = [sp[:, kh:kh + Hout, kw:kw + Wout, :]
            for kh in range(KH) for kw in range(KW)]
    patches = jnp.stack(cols, axis=3).reshape(M, K)
    patches = jnp.pad(patches, ((0, Mp - M), (0, Kp - K)))

    # 4) weight (Kp, Coutp) bf16, bias (1, Coutp) f32, zero padded.
    wm = jnp.pad(w_hwio.reshape(K, Cout),
                 ((0, Kp - K), (0, Coutp - Cout))).astype(jnp.bfloat16)
    bm = jnp.pad(b, (0, Coutp - Cout)).reshape(1, Coutp).astype(jnp.float32)

    # 5) Pallas matmul + bias + ReLU over 128-row M tiles.
    out = pl.pallas_call(
        _matmul_bias_relu_kernel,
        out_shape=jax.ShapeDtypeStruct((Mp, Coutp), jnp.float32),
        grid=(Mp // tile_m,),
        in_specs=[
            pl.BlockSpec((tile_m, Kp), lambda i: (i, 0)),
            pl.BlockSpec((Kp, Coutp), lambda i: (0, 0)),
            pl.BlockSpec((1, Coutp), lambda i: (0, 0)),
        ],
        out_specs=pl.BlockSpec((tile_m, Coutp), lambda i: (i, 0)),
        compiler_params=pltpu.CompilerParams(
            dimension_semantics=("parallel",)),
    )(patches, wm, bm)

    # 6) glue: strip padding, (M, Cout) -> NCHW.
    out = out[:M, :Cout].reshape(N, Hout, Wout, Cout)
    return jnp.transpose(out, (0, 3, 1, 2)).astype(x_nchw.dtype)


if __name__ == "__main__":
    key = jax.random.PRNGKey(0)
    kx, kw, kb = jax.random.split(key, 3)

    # small shapes consistent with the module (num_channels chosen as 4)
    N, Cin, H, W = 2, 4, 16, 16
    KH = KW = 7
    Cout = 64

    x = jax.random.normal(kx, (N, Cin, H, W), jnp.float32)

    # deterministic Conv2d-style init (kaiming-uniform-like bounds)
    fan_in = Cin * KH * KW
    bound = 1.0 / (fan_in ** 0.5)
    w = jax.random.uniform(kw, (KH, KW, Cin, Cout), jnp.float32, -bound, bound)
    b = jax.random.uniform(kb, (Cout,), jnp.float32, -bound, bound)

    y = jax.jit(network_forward)(x, w, b)
    y = jax.block_until_ready(y)

    # pure-JAX f32 reference: relu(conv2d(sigmoid(x)) + b), zero padding = 1
    sig = jax.nn.sigmoid(x)
    ref = lax.conv_general_dilated(
        sig, jnp.transpose(w, (3, 2, 0, 1)),
        window_strides=(1, 1), padding=((1, 1), (1, 1)),
        dimension_numbers=("NCHW", "OIHW", "NCHW"))
    ref = jnp.maximum(ref + b.reshape(1, Cout, 1, 1), 0.0)

    assert y.shape == (N, Cout, H - 4, W - 4), y.shape
    # tolerance relaxed vs pure f32: dot operands are bf16 (MXU native).
    assert jnp.allclose(y, ref, atol=1e-2, rtol=1e-2), \
        float(jnp.max(jnp.abs(y - ref)))
    print("KERNEL_OK")
</pallas_src>

<mosaic_0001>
module attributes {stable_mosaic.version = 11 : i64} {
  func.func @_sigmoid_kernel(%arg0: i32, %arg1: memref<16x128xf32, #tpu.memory_space<vmem>>, %arg2: memref<16x128xbf16, #tpu.memory_space<vmem>>) attributes {dimension_semantics = [#tpu.dimension_semantics<arbitrary>], iteration_bounds = array<i64: 1>, scalar_prefetch = 0 : i64, scratch_operands = 0 : i64, tpu.core_type = #tpu.core_type<tc>, window_params = [{pipeline_mode = #tpu.pipeline_mode<synchronous>, transform_indices = @transform_0, window_bounds = array<i64: 16, 128>}, {pipeline_mode = #tpu.pipeline_mode<synchronous>, transform_indices = @transform_1, window_bounds = array<i64: 16, 128>}]} {
    %c0 = arith.constant 0 : index
    %c0_0 = arith.constant 0 : index
    %0 = vector.load %arg1[%c0, %c0_0] : memref<16x128xf32, #tpu.memory_space<vmem>>, vector<16x128xf32>
    %cst = arith.constant 0.000000e+00 : f32
    %1 = vector.broadcast %cst : f32 to vector<16x128xf32>
    %2 = arith.subf %1, %0 : vector<16x128xf32>
    %3 = math.exp %2 : vector<16x128xf32>
    %cst_1 = arith.constant 1.000000e+00 : f32
    %4 = vector.broadcast %cst_1 : f32 to vector<16x128xf32>
    %5 = arith.addf %4, %3 : vector<16x128xf32>
    %6 = tpu.reciprocal %5 {approx = true} : vector<16x128xf32> -> vector<16x128xf32>
    %7 = arith.truncf %6 : vector<16x128xf32> to vector<16x128xbf16>
    %c0_2 = arith.constant 0 : index
    %c0_3 = arith.constant 0 : index
    %8 = vector.load %arg2[%c0_2, %c0_3] : memref<16x128xbf16, #tpu.memory_space<vmem>>, vector<16x128xbf16>
    tpu.vector_store %arg2[%c0_2, %c0_3], %7 {strides = array<i32>} : memref<16x128xbf16, #tpu.memory_space<vmem>>, vector<16x128xbf16>,
    return
  }
  func.func @transform_0(%arg0: i32) -> (i32, i32) {
    %c0_i32 = arith.constant 0 : i32
    %c0_i32_0 = arith.constant 0 : i32
    %c0_i32_1 = arith.constant 0 : i32
    return %c0_i32, %c0_i32_0 : i32, i32
  }
  func.func @transform_1(%arg0: i32) -> (i32, i32) {
    %c0_i32 = arith.constant 0 : i32
    %c0_i32_0 = arith.constant 0 : i32
    %c0_i32_1 = arith.constant 0 : i32
    return %c0_i32, %c0_i32_0 : i32, i32
  }
}

module attributes {stable_mosaic.version = 11 : i64} {
  func.func @_matmul_bias_relu_kernel(%arg0: i32, %arg1: memref<128x256xbf16, #tpu.memory_space<vmem>>, %arg2: memref<256x128xbf16, #tpu.memory_space<vmem>>, %arg3: memref<1x128xf32, #tpu.memory_space<vmem>>, %arg4: memref<128x128xf32, #tpu.memory_space<vmem>>) attributes {dimension_semantics = [#tpu.dimension_semantics<parallel>], iteration_bounds = array<i64: 3>, scalar_prefetch = 0 : i64, scratch_operands = 0 : i64, tpu.core_type = #tpu.core_type<tc>, window_params = [{transform_indices = @transform_0, window_bounds = array<i64: 128, 256>}, {pipeline_mode = #tpu.pipeline_mode<synchronous>, transform_indices = @transform_1, window_bounds = array<i64: 256, 128>}, {pipeline_mode = #tpu.pipeline_mode<synchronous>, transform_indices = @transform_2, window_bounds = array<i64: 1, 128>}, {transform_indices = @transform_3, window_bounds = array<i64: 128, 128>}]} {
    %c0 = arith.constant 0 : index
    %c0_0 = arith.constant 0 : index
    %0 = vector.load %arg1[%c0, %c0_0] : memref<128x256xbf16, #tpu.memory_space<vmem>>, vector<128x256xbf16>
    %c0_1 = arith.constant 0 : index
    %c0_2 = arith.constant 0 : index
    %1 = vector.load %arg2[%c0_1, %c0_2] : memref<256x128xbf16, #tpu.memory_space<vmem>>, vector<256x128xbf16>
    %cst = arith.constant dense<0.000000e+00> : vector<128x128xf32>
    %2 = tpu.matmul %0, %1, %cst {dimension_numbers = #tpu.dot_dimension_numbers<[1], [0], [0], [1], [0, 0, 1, 1], [], []>} : vector<128x256xbf16>, vector<256x128xbf16>, vector<128x128xf32> -> vector<128x128xf32>
    %c0_3 = arith.constant 0 : index
    %c0_4 = arith.constant 0 : index
    %3 = vector.load %arg3[%c0_3, %c0_4] : memref<1x128xf32, #tpu.memory_space<vmem>>, vector<1x128xf32>
    %4 = vector.broadcast %3 : vector<1x128xf32> to vector<128x128xf32>
    %5 = arith.addf %2, %4 : vector<128x128xf32>
    %cst_5 = arith.constant 0.000000e+00 : f32
    %6 = vector.broadcast %cst_5 : f32 to vector<128x128xf32>
    %7 = arith.maximumf %5, %6 : vector<128x128xf32>
    %c0_6 = arith.constant 0 : index
    %c0_7 = arith.constant 0 : index
    %8 = vector.load %arg4[%c0_6, %c0_7] : memref<128x128xf32, #tpu.memory_space<vmem>>, vector<128x128xf32>
    tpu.vector_store %arg4[%c0_6, %c0_7], %7 {strides = array<i32>} : memref<128x128xf32, #tpu.memory_space<vmem>>, vector<128x128xf32>,
    return
  }
  func.func @transform_0(%arg0: i32) -> (i32, i32) {
    %c0_i32 = arith.constant 0 : i32
    %c0_i32_0 = arith.constant 0 : i32
    return %arg0, %c0_i32 : i32, i32
  }
  func.func @transform_1(%arg0: i32) -> (i32, i32) {
    %c0_i32 = arith.constant 0 : i32
    %c0_i32_0 = arith.constant 0 : i32
    %c0_i32_1 = arith.constant 0 : i32
    return %c0_i32, %c0_i32_0 : i32, i32
  }
  func.func @transform_2(%arg0: i32) -> (i32, i32) {
    %c0_i32 = arith.constant 0 : i32
    %c0_i32_0 = arith.constant 0 : i32
    %c0_i32_1 = arith.constant 0 : i32
    return %c0_i32, %c0_i32_0 : i32, i32
  }
  func.func @transform_3(%arg0: i32) -> (i32, i32) {
    %c0_i32 = arith.constant 0 : i32
    %c0_i32_0 = arith.constant 0 : i32
    return %arg0, %c0_i32 : i32, i32
  }
}

</mosaic_0001>

<llo_original>
// kernel: network_forward.2
$region0: #{network_forward.2}
  #allocation0 [shape = 'u32[]', space=smem, size = 0x4, offset = 0x4, fixed_abs, tag = 'smem constant byte address 0x4 - core index']
  #allocation1 [shape = 'u32[144,128]{1,0:T(1,128)}', space=vmem, size = 0x12000, scoped, tag = 'internal scratch']
  %s0 = inlined_call_operand.vmem [shape: f32[16,128], index: 0, kind: input, shape index: {}]
  %s1 = inlined_call_operand.vmem [shape: bf16[16,128], index: 1, kind: output, shape index: {}]
  %s2 = sld [smem:[#allocation0]]
  $region14: #{network_forward.2} parent=0
    _
  %s4 = ssub.s32 1, %s2
  %s5 = scalar_select 0, %s4, %s2
  // Predicated region
  $region2: #{network_forward.2} parent=0 // pred_check
    _
  $region3: #{network_forward.2} parent=0 // pred_check_branch
    %7 = sbr.rel (0) target = $region5
  $region4: #{network_forward.2} parent=0 // pred_region
    _
  $region5: #{network_forward.2} parent=0 // pred_fallthru
    _
  %v8 = vld [vmem:[%s0] sm:$0xff]
  %v9 = vld [vmem:[%s0 + $0x8] sm:$0xff]
  %v10 = vsub.f32 0.0, %v8
  %v11 = vsub.f32 0.0, %v9
  %v12 = vmul.f32 %v10, 1.442695
  %v13 = vpow.pop %v12
  %v14 = vmul.f32 %v11, 1.442695
  %v15 = vpow.pop %v14
  %v16 = vadd.f32 %v13, 1.0
  %v17 = vadd.f32 %v15, 1.0
  %v18 = vrcp.pop %v16
  %v19 = vrcp.pop %v17
  %v20 = vpack.c.bf16 %v19, %v18
  %v22 = vunpack.c.l.b16 %v20
  %v23 = vunpack.c.h.b16 %v20
  %v24 = vpack.c.b16 %v22, %v22
  %v25 = vpack.c.b16 %v23, %v23
  %28 = vst [vmem:[%s1] sm:$0xf] %v24
  %29 = vst [vmem:[%s1 + $0x4] sm:$0xf] %v25
  // Predicated region
  $region6: #{network_forward.2} parent=0 // pred_check
    _
  $region7: #{network_forward.2} parent=0 // pred_check_branch
    %31 = sbr.rel (0) target = $region9
  $region8: #{network_forward.2} parent=0 // pred_region
    _
  $region9: #{network_forward.2} parent=0 // pred_fallthru
    _
  // Predicated region
  $region10: #{network_forward.2} parent=0 // pred_check
    _
  $region11: #{network_forward.2} parent=0 // pred_check_branch
    %33 = sbr.rel (0) target = $region13
  $region12: #{network_forward.2} parent=0 // pred_region
    _
  $region13: #{network_forward.2} parent=0 // pred_fallthru
    _

// kernel: network_forward.3
$region0: #{network_forward.3}
  #allocation0 [shape = 'u32[]', space=smem, size = 0x4, offset = 0x4, fixed_abs, tag = 'smem constant byte address 0x4 - core index']
  #allocation1 [shape = 'u32[144,128]{1,0:T(1,128)}', space=vmem, size = 0x12000, scoped, tag = 'internal scratch']
  %s0 = inlined_call_operand.vmem [shape: bf16[384,256], index: 0, kind: input, shape index: {}]
  %s1 = inlined_call_operand.vmem [shape: bf16[256,128], index: 1, kind: input, shape index: {}]
  %s2 = inlined_call_operand.vmem [shape: f32[1,128], index: 2, kind: input, shape index: {}]
  %s3 = inlined_call_operand.vmem [shape: f32[384,128], index: 3, kind: output, shape index: {}]
  %s4 = sld [smem:[#allocation0]]
  $region45: #{network_forward.3} parent=0
    _
  %s6 = ssub.s32 1, %s4
  %s7 = scalar_select 0, %s6, %s4
  loop: start=0, step=1, limit=5
  $region2: #{network_forward.3} parent=0 // loop_pre_header
    _
  $region3: #{network_forward.3} parent=0 // loop_header
    %s9 = sphi 0, %s13
    %p10 = scmp.ge.s32.totalorder %s9, 5
    %s19 = sphi 0, %s21
    %s22 = sphi 0, %s19
    %s23 = sphi 0, %s22
    %s39 = sphi 0, %s23
    %s43 = sphi 0, %s43
    %s45 = sphi 0, %s43
    %s46 = sphi 0, %s45
    %s60 = sphi 0, %s46
    %s64 = sphi 0, %s64
    %s66 = sphi 0, %s64
    %s67 = sphi 0, %s66
    %s81 = sphi 0, %s67
    %s87 = sphi 0, %s89
    %s90 = sphi 0, %s87
    %s91 = sphi 0, %s90
    %s107 = sphi 0, %s91
  $region4: #{network_forward.3} parent=0 // loop_header_branch
    %12 = sbr.rel (%p10) target = $region8
  $region5: #{network_forward.3} parent=0 // loop_body
    %s14 = ssub.s32 %s9, 1
    %s15 = ssub.s32 %s9, 2
    %s16 = sadd.s32 %s9, 1
    %s17 = ssub.s32 %s9, %s16
    %p18 = scmp.eq.s32.totalorder %s17, 0
    %s20 = sadd.s32 %s19, 1
    %s21 = scalar_select %p18, %s19, %s20
    %p24 = pneg %p18
    %p25 = scmp.eq.s32.totalorder %s9, 2
    %p26 = por %p24, %p25
    %p27 = scmp.ne.s32.totalorder %s19, %s22
    %p28 = scmp.eq.s32.totalorder %s9, 0
    %p29 = por %p27, %p28
    %p30 = scmp.ne.s32.totalorder %s19, %s22
    %p31 = scmp.eq.s32.totalorder %s14, 2
    %p32 = por %p30, %p31
    %p33 = scmp.ne.s32.totalorder %s22, %s23
    %p34 = scmp.eq.s32.totalorder %s14, 0
    %p35 = por %p33, %p34
    %p36 = scmp.ne.s32.totalorder %s22, %s23
    %p37 = scmp.eq.s32.totalorder %s15, 2
    %p38 = por %p36, %p37
    %p40 = scmp.ne.s32.totalorder %s23, %s39
    %p41 = scmp.eq.s32.totalorder %s15, 0
    %p42 = por %p40, %p41
    %s44 = sadd.s32 %s43, 1
    %p47 = scmp.eq.s32.totalorder %s9, 2
    %p48 = scmp.ne.s32.totalorder %s43, %s45
    %p49 = scmp.eq.s32.totalorder %s9, 0
    %p50 = por %p48, %p49
    %p51 = scmp.ne.s32.totalorder %s43, %s45
    %p52 = scmp.eq.s32.totalorder %s14, 2
    %p53 = por %p51, %p52
    %p54 = scmp.ne.s32.totalorder %s45, %s46
    %p55 = scmp.eq.s32.totalorder %s14, 0
    %p56 = por %p54, %p55
    %p57 = scmp.ne.s32.totalorder %s45, %s46
    %p58 = scmp.eq.s32.totalorder %s15, 2
    %p59 = por %p57, %p58
    %p61 = scmp.ne.s32.totalorder %s46, %s60
    %p62 = scmp.eq.s32.totalorder %s15, 0
    %p63 = por %p61, %p62
    %s65 = sadd.s32 %s64, 1
    %p68 = scmp.eq.s32.totalorder %s9, 2
    %p69 = scmp.ne.s32.totalorder %s64, %s66
    %p70 = scmp.eq.s32.totalorder %s9, 0
    %p71 = por %p69, %p70
    %p72 = scmp.ne.s32.totalorder %s64, %s66
    %p73 = scmp.eq.s32.totalorder %s14, 2
    %p74 = por %p72, %p73
    %p75 = scmp.ne.s32.totalorder %s66, %s67
    %p76 = scmp.eq.s32.totalorder %s14, 0
    %p77 = por %p75, %p76
    %p78 = scmp.ne.s32.totalorder %s66, %s67
    %p79 = scmp.eq.s32.totalorder %s15, 2
    %p80 = por %p78, %p79
    %p82 = scmp.ne.s32.totalorder %s67, %s81
    %p83 = scmp.eq.s32.totalorder %s15, 0
    %p84 = por %p82, %p83
    %s85 = ssub.s32 %s9, %s16
    %p86 = scmp.eq.s32.totalorder %s85, 0
    %s88 = sadd.s32 %s87, 1
    %s89 = scalar_select %p86, %s87, %s88
    %p92 = pneg %p86
    %p93 = scmp.eq.s32.totalorder %s9, 2
    %p94 = por %p92, %p93
    %p95 = scmp.ne.s32.totalorder %s87, %s90
    %p96 = scmp.eq.s32.totalorder %s9, 0
    %p97 = por %p95, %p96
    %p98 = scmp.ne.s32.totalorder %s87, %s90
    %p99 = scmp.eq.s32.totalorder %s14, 2
    %p100 = por %p98, %p99
    %p101 = scmp.ne.s32.totalorder %s90, %s91
    %p102 = scmp.eq.s32.totalorder %s14, 0
    %p103 = por %p101, %p102
    %p104 = scmp.ne.s32.totalorder %s90, %s91
    %p105 = scmp.eq.s32.totalorder %s15, 2
    %p106 = por %p104, %p105
    %p108 = scmp.ne.s32.totalorder %s91, %s107
    %p109 = scmp.eq.s32.totalorder %s15, 0
    %p110 = por %p108, %p109
    %p111 = scmp.le.s32.totalorder 1, %s9
    %p112 = scmp.lt.s32.totalorder %s9, 4
    %p113 = pnand %p111, %p112
    %p114 = pneg %p113
    // Predicated region
    $region9: #{network_forward.3} parent=5 // pred_check
      _
    $region10: #{network_forward.3} parent=5 // pred_check_branch
      %116 = sbr.rel (%p113) target = $region12
    $region11: #{network_forward.3} parent=5 // pred_region
      %s117 = ssub.s32 %s9, 1
      // Predicated region
      $region13: #{network_forward.3} parent=11 // pred_check
        %p118 = pneg %p56
      $region14: #{network_forward.3} parent=11 // pred_check_branch
        %120 = sbr.rel (%p118) target = $region16
      $region15: #{network_forward.3} parent=11 // pred_region
        _
      $region16: #{network_forward.3} parent=11 // pred_fallthru
        _
      // Predicated region
      $region17: #{network_forward.3} parent=11 // pred_check
        %p121 = pneg %p77
      $region18: #{network_forward.3} parent=11 // pred_check_branch
        %123 = sbr.rel (%p121) target = $region20
      $region19: #{network_forward.3} parent=11 // pred_region
        _
      $region20: #{network_forward.3} parent=11 // pred_fallthru
        _
    $region12: #{network_forward.3} parent=5 // pred_fallthru
      _
    %p124 = scmp.lt.s32.totalorder %s9, 3
    // Predicated region
    $region21: #{network_forward.3} parent=5 // pred_check
      %p125 = pneg %p124
    $region22: #{network_forward.3} parent=5 // pred_check_branch
      %127 = sbr.rel (%p125) target = $region24
    $region23: #{network_forward.3} parent=5 // pred_region
      // Predicated region
      $region25: #{network_forward.3} parent=23 // pred_check
        %p128 = pneg %p29
      $region26: #{network_forward.3} parent=23 // pred_check_branch
        %130 = sbr.rel (%p128) target = $region28
      $region27: #{network_forward.3} parent=23 // pred_region
        %s131 = smul.u32 16, %s9
        %p132 = scmp.lt.s32.totalorder %s131, 47
        %s133 = scalar_select %p132, %s131, 47
        %s134 = smul.addr %s133, 2
        %s135 = smul.addr %s134, 4
        %s136 = scalar_lea.vmem %s0, %s135
        %s137 = smul.u32 16, %s9
      $region28: #{network_forward.3} parent=23 // pred_fallthru
        _
    $region24: #{network_forward.3} parent=5 // pred_fallthru
      _
    %p138 = scmp.le.s32.totalorder 1, %s9
    %p139 = scmp.lt.s32.totalorder %s9, 4
    %p140 = pnand %p138, %p139
    %p141 = pneg %p140
    // Predicated region
    $region29: #{network_forward.3} parent=5 // pred_check
      _
    $region30: #{network_forward.3} parent=5 // pred_check_branch
      %143 = sbr.rel (%p140) target = $region32
    $region31: #{network_forward.3} parent=5 // pred_region
      %s144 = ssub.s32 %s9, 1
      %s145 = smul.u32 16, %s14
      %p146 = scmp.lt.s32.totalorder %s145, 47
      %s147 = scalar_select %p146, %s145, 47
      %s148 = smul.addr %s147, 2
      %s149 = smul.addr %s148, 4
      %s150 = scalar_lea.vmem %s0, %s149
      %p151 = pneg %p35
      %p152 = pneg %p32
      %p153 = pneg %p56
      %p154 = pneg %p53
      %p155 = pneg %p77
      %p156 = pneg %p74
      %p157 = pneg %p103
      %p158 = pneg %p100
      %s159 = smul.u32 16, %s14
      %p160 = scmp.lt.s32.totalorder %s159, 47
      %s161 = scalar_select %p160, %s159, 47
      %s162 = smul.addr %s161, 8
      %s163 = scalar_lea.vmem %s3, %s162
      %s164 = smul.u32 16, %s14
      %p165 = scmp.lt.s32.totalorder %s164, 47
      %s166 = scalar_select %p165, %s164, 47
      %s167 = smul.addr %s166, 2
      %s168 = smul.addr %s167, 4
      %s169 = scalar_lea.vmem %s0, %s168
      %s170 = smul.u32 16, %s14
      %s171 = smul.u32 16, %s14
      %p172 = scmp.lt.s32.totalorder %s171, 47
      %s173 = scalar_select %p172, %s171, 47
      %s174 = smul.addr %s173, 8
      %s175 = scalar_lea.vmem %s3, %s174
      %s176 = smul.u32 16, %s14
      %v178 = vld [vmem:[%s169] sm:$0xff]
      %v179 = vld [vmem:[%s169 + $0x8] sm:$0xff]
      %v180 = vld [vmem:[%s169 + $0x10] sm:$0xff]
      %v181 = vld [vmem:[%s169 + $0x18] sm:$0xff]
      %v182 = vld [vmem:[%s169 + $0x20] sm:$0xff]
      %v183 = vld [vmem:[%s169 + $0x28] sm:$0xff]
      %v184 = vld [vmem:[%s169 + $0x30] sm:$0xff]
      %v185 = vld [vmem:[%s169 + $0x38] sm:$0xff]
      %v186 = vld [vmem:[%s169 + $0x40] sm:$0xff]
      %v187 = vld [vmem:[%s169 + $0x48] sm:$0xff]
      %v188 = vld [vmem:[%s169 + $0x50] sm:$0xff]
      %v189 = vld [vmem:[%s169 + $0x58] sm:$0xff]
      %v190 = vld [vmem:[%s169 + $0x60] sm:$0xff]
      %v191 = vld [vmem:[%s169 + $0x68] sm:$0xff]
      %v192 = vld [vmem:[%s169 + $0x70] sm:$0xff]
      %v193 = vld [vmem:[%s169 + $0x78] sm:$0xff]
      %v194 = vld [vmem:[%s1] sm:$0xf]
      %v195 = vld [vmem:[%s1 + $0x4] sm:$0xf]
      %v196 = vld [vmem:[%s1 + $0x8] sm:$0xf]
      %v197 = vld [vmem:[%s1 + $0xc] sm:$0xf]
      %v198 = vld [vmem:[%s1 + $0x10] sm:$0xf]
      %v199 = vld [vmem:[%s1 + $0x14] sm:$0xf]
      %v200 = vld [vmem:[%s1 + $0x18] sm:$0xf]
      %v201 = vld [vmem:[%s1 + $0x1c] sm:$0xf]
      %v202 = vld [vmem:[%s1 + $0x20] sm:$0xf]
      %v203 = vld [vmem:[%s1 + $0x24] sm:$0xf]
      %v204 = vld [vmem:[%s1 + $0x28] sm:$0xf]
      %v205 = vld [vmem:[%s1 + $0x2c] sm:$0xf]
      %v206 = vld [vmem:[%s1 + $0x30] sm:$0xf]
      %v207 = vld [vmem:[%s1 + $0x34] sm:$0xf]
      %v208 = vld [vmem:[%s1 + $0x38] sm:$0xf]
      %v209 = vld [vmem:[%s1 + $0x3c] sm:$0xf]
      %v210 = vld [vmem:[%s1 + $0x40] sm:$0xf]
      %v211 = vld [vmem:[%s1 + $0x44] sm:$0xf]
      %v212 = vld [vmem:[%s1 + $0x48] sm:$0xf]
      %v213 = vld [vmem:[%s1 + $0x4c] sm:$0xf]
      %v214 = vld [vmem:[%s1 + $0x50] sm:$0xf]
      %v215 = vld [vmem:[%s1 + $0x54] sm:$0xf]
      %v216 = vld [vmem:[%s1 + $0x58] sm:$0xf]
      %v217 = vld [vmem:[%s1 + $0x5c] sm:$0xf]
      %v218 = vld [vmem:[%s1 + $0x60] sm:$0xf]
      %v219 = vld [vmem:[%s1 + $0x64] sm:$0xf]
      %v220 = vld [vmem:[%s1 + $0x68] sm:$0xf]
      %v221 = vld [vmem:[%s1 + $0x6c] sm:$0xf]
      %v222 = vld [vmem:[%s1 + $0x70] sm:$0xf]
      %v223 = vld [vmem:[%s1 + $0x74] sm:$0xf]
      %v224 = vld [vmem:[%s1 + $0x78] sm:$0xf]
      %v225 = vld [vmem:[%s1 + $0x7c] sm:$0xf]
      %v226 = vld [vmem:[%s2] sm:$0x1]
      %v228 = vlaneseq
      %v229 = vshrl.u32 %v228, 7
      %v230 = vsub.s32 0, %v229
      %v231 = vrot.slane %v226, %v230
      %v249 = vunpack.c.l.b16 %v178
      %v250 = vunpack.c.h.b16 %v178
      %v251 = vunpack.c.l.b16 %v179
      %v252 = vunpack.c.h.b16 %v179
      %v253 = vunpack.c.l.b16 %v180
      %v254 = vunpack.c.h.b16 %v180
      %v255 = vunpack.c.l.b16 %v181
      %v256 = vunpack.c.h.b16 %v181
      %v257 = vunpack.c.l.b16 %v182
      %v258 = vunpack.c.h.b16 %v182
      %v259 = vunpack.c.l.b16 %v183
      %v260 = vunpack.c.h.b16 %v183
      %v261 = vunpack.c.l.b16 %v184
      %v262 = vunpack.c.h.b16 %v184
      %v263 = vunpack.c.l.b16 %v185
      %v264 = vunpack.c.h.b16 %v185
      %v265 = vunpack.c.l.b16 %v186
      %v266 = vunpack.c.h.b16 %v186
      %v267 = vunpack.c.l.b16 %v187
      %v268 = vunpack.c.h.b16 %v187
      %v269 = vunpack.c.l.b16 %v188
      %v270 = vunpack.c.h.b16 %v188
      %v271 = vunpack.c.l.b16 %v189
      %v272 = vunpack.c.h.b16 %v189
      %v273 = vunpack.c.l.b16 %v190
      %v274 = vunpack.c.h.b16 %v190
      %v275 = vunpack.c.l.b16 %v191
      %v276 = vunpack.c.h.b16 %v191
      %v277 = vunpack.c.l.b16 %v192
      %v278 = vunpack.c.h.b16 %v192
      %v279 = vunpack.c.l.b16 %v193
      %v280 = vunpack.c.h.b16 %v193
      %v281 = vpack.c.b16 %v251, %v249
      %v282 = vpack.c.b16 %v252, %v250
      %v283 = vpack.c.b16 %v255, %v253
      %v284 = vpack.c.b16 %v256, %v254
      %v285 = vpack.c.b16 %v259, %v257
      %v286 = vpack.c.b16 %v260, %v258
      %v287 = vpack.c.b16 %v263, %v261
      %v288 = vpack.c.b16 %v264, %v262
      %v289 = vpack.c.b16 %v267, %v265
      %v290 = vpack.c.b16 %v268, %v266
      %v291 = vpack.c.b16 %v271, %v269
      %v292 = vpack.c.b16 %v272, %v270
      %v293 = vpack.c.b16 %v275, %v273
      %v294 = vpack.c.b16 %v276, %v274
      %v295 = vpack.c.b16 %v279, %v277
      %v296 = vpack.c.b16 %v280, %v278
      %v345 = vunpack.c.l.b16 %v194
      %v346 = vunpack.c.l.b16 %v195
      %v347 = vunpack.c.l.b16 %v196
      %v348 = vunpack.c.l.b16 %v197
      %v349 = vunpack.c.l.b16 %v198
      %v350 = vunpack.c.l.b16 %v199
      %v351 = vunpack.c.l.b16 %v200
      %v352 = vunpack.c.l.b16 %v201
      %v353 = vunpack.c.l.b16 %v202
      %v354 = vunpack.c.l.b16 %v203
      %v355 = vunpack.c.l.b16 %v204
      %v356 = vunpack.c.l.b16 %v205
      %v357 = vunpack.c.l.b16 %v206
      %v358 = vunpack.c.l.b16 %v207
      %v359 = vunpack.c.l.b16 %v208
      %v360 = vunpack.c.l.b16 %v209
      %v361 = vunpack.c.l.b16 %v210
      %v362 = vunpack.c.l.b16 %v211
      %v363 = vunpack.c.l.b16 %v212
      %v364 = vunpack.c.l.b16 %v213
      %v365 = vunpack.c.l.b16 %v214
      %v366 = vunpack.c.l.b16 %v215
      %v367 = vunpack.c.l.b16 %v216
      %v368 = vunpack.c.l.b16 %v217
      %v369 = vunpack.c.l.b16 %v218
      %v370 = vunpack.c.l.b16 %v219
      %v371 = vunpack.c.l.b16 %v220
      %v372 = vunpack.c.l.b16 %v221
      %v373 = vunpack.c.l.b16 %v222
      %v374 = vunpack.c.l.b16 %v223
      %v375 = vunpack.c.l.b16 %v224
      %v376 = vunpack.c.l.b16 %v225
      %v377 = vpack.c.b16 %v346, %v345
      %v378 = vpack.c.b16 %v348, %v347
      %v379 = vpack.c.b16 %v350, %v349
      %v380 = vpack.c.b16 %v352, %v351
      %v381 = vpack.c.b16 %v354, %v353
      %v382 = vpack.c.b16 %v356, %v355
      %v383 = vpack.c.b16 %v358, %v357
      %v384 = vpack.c.b16 %v360, %v359
      %v385 = vpack.c.b16 %v362, %v361
      %v386 = vpack.c.b16 %v364, %v363
      %v387 = vpack.c.b16 %v366, %v365
      %v388 = vpack.c.b16 %v368, %v367
      %v389 = vpack.c.b16 %v370, %v369
      %v390 = vpack.c.b16 %v372, %v371
      %v391 = vpack.c.b16 %v374, %v373
      %v392 = vpack.c.b16 %v376, %v375
      %409 = vmatprep.subr.bf16.mxu0 0
      %410 = vmatpush1.bf16.msra.mxu0 %v384
      %411 = vmatprep.subr.bf16.mxu0 0
      %412 = vmatpush1.bf16.msra.mxu0 %v383
      %413 = vmatprep.subr.bf16.mxu0 0
      %414 = vmatpush1.bf16.msra.mxu0 %v382
      %415 = vmatprep.subr.bf16.mxu0 0
      %416 = vmatpush1.bf16.msra.mxu0 %v381
      %417 = vmatprep.subr.bf16.mxu0 0
      %418 = vmatpush1.bf16.msra.mxu0 %v380
      %419 = vmatprep.subr.bf16.mxu0 0
      %420 = vmatpush1.bf16.msra.mxu0 %v379
      %421 = vmatprep.subr.bf16.mxu0 0
      %422 = vmatpush1.bf16.msra.mxu0 %v378
      %423 = vmatprep.subr.bf16.mxu0 0
      %424 = vmatpush1.bf16.msra.mxu0 %v377
      %425 = vmatprep.subr.bf16.mxu0 0
      %426 = vmatpush2.bf16.msra.mxu0 %v392
      %427 = vmatprep.subr.bf16.mxu0 0
      %428 = vmatpush2.bf16.msra.mxu0 %v391
      %429 = vmatprep.subr.bf16.mxu0 0
      %430 = vmatpush2.bf16.msra.mxu0 %v390
      %431 = vmatprep.subr.bf16.mxu0 0
      %432 = vmatpush2.bf16.msra.mxu0 %v389
      %433 = vmatprep.subr.bf16.mxu0 0
      %434 = vmatpush2.bf16.msra.mxu0 %v388
      %435 = vmatprep.subr.bf16.mxu0 0
      %436 = vmatpush2.bf16.msra.mxu0 %v387
      %437 = vmatprep.subr.bf16.mxu0 0
      %438 = vmatpush2.bf16.msra.mxu0 %v386
      %439 = vmatprep.subr.bf16.mxu0 0
      %440 = vmatpush2.bf16.msra.mxu0 %v385
      %441 = vmatprep.mubr.bf16.mxu0 %v282
      %442 = vmatmul.mubr.bf16.gmra.mxu0 %v281
      %v443 = vpop.f32.mrf.mxu0
      %v444 = vadd.f32 %v231, %v443
      %v445 = vpop.f32.mrf.mxu0
      %v446 = vpop.f32.mrf.mxu0
      %v447 = vadd.f32 %v231, %v446
      %v448 = vpop.f32.mrf.mxu0
      %449 = vmatprep.mubr.bf16.mxu0 %v284
      %450 = vmatmul.mubr.bf16.gmra.mxu0 %v283
      %v451 = vpop.f32.mrf.mxu0
      %v452 = vadd.f32 %v231, %v451
      %v453 = vpop.f32.mrf.mxu0
      %v454 = vpop.f32.mrf.mxu0
      %v455 = vadd.f32 %v231, %v454
      %v456 = vpop.f32.mrf.mxu0
      %457 = vmatprep.mubr.bf16.mxu0 %v286
      %458 = vmatmul.mubr.bf16.gmra.mxu0 %v285
      %v459 = vpop.f32.mrf.mxu0
      %v460 = vadd.f32 %v231, %v459
      %v461 = vpop.f32.mrf.mxu0
      %v462 = vpop.f32.mrf.mxu0
      %v463 = vadd.f32 %v231, %v462
      %v464 = vpop.f32.mrf.mxu0
      %465 = vmatprep.mubr.bf16.mxu0 %v288
      %466 = vmatmul.mubr.bf16.gmra.mxu0 %v287
      %v467 = vpop.f32.mrf.mxu0
      %v468 = vadd.f32 %v231, %v467
      %v469 = vpop.f32.mrf.mxu0
      %v470 = vpop.f32.mrf.mxu0
      %v471 = vadd.f32 %v231, %v470
      %v472 = vpop.f32.mrf.mxu0
      %473 = vmatprep.mubr.bf16.mxu0 %v290
      %474 = vmatmul.mubr.bf16.gmra.mxu0 %v289
      %v475 = vpop.f32.mrf.mxu0
      %v476 = vadd.f32 %v231, %v475
      %v477 = vpop.f32.mrf.mxu0
      %v478 = vpop.f32.mrf.mxu0
      %v479 = vadd.f32 %v231, %v478
      %v480 = vpop.f32.mrf.mxu0
      %481 = vmatprep.mubr.bf16.mxu0 %v292
      %482 = vmatmul.mubr.bf16.gmra.mxu0 %v291
      %v483 = vpop.f32.mrf.mxu0
      %v484 = vadd.f32 %v231, %v483
      %v485 = vpop.f32.mrf.mxu0
      %v486 = vpop.f32.mrf.mxu0
      %v487 = vadd.f32 %v231, %v486
      %v488 = vpop.f32.mrf.mxu0
      %489 = vmatprep.mubr.bf16.mxu0 %v294
      %490 = vmatmul.mubr.bf16.gmra.mxu0 %v293
      %v491 = vpop.f32.mrf.mxu0
      %v492 = vadd.f32 %v231, %v491
      %v493 = vpop.f32.mrf.mxu0
      %v494 = vpop.f32.mrf.mxu0
      %v495 = vadd.f32 %v231, %v494
      %v496 = vpop.f32.mrf.mxu0
      %497 = vmatprep.mubr.bf16.mxu0 %v296
      %498 = vmatmul.mubr.bf16.gmra.mxu0 %v295
      %v499 = vpop.f32.mrf.mxu0
      %v500 = vadd.f32 %v231, %v499
      %v501 = vpop.f32.mrf.mxu0
      %v502 = vpop.f32.mrf.mxu0
      %v503 = vadd.f32 %v231, %v502
      %v504 = vpop.f32.mrf.mxu0
      %505 = vdwg.mxu0
      %v506 = vmax.f32 %v444, 0.0
      %v507 = vmax.f32 %v447, 0.0
      %v508 = vmax.f32 %v452, 0.0
      %v509 = vmax.f32 %v455, 0.0
      %v510 = vmax.f32 %v460, 0.0
      %v511 = vmax.f32 %v463, 0.0
      %v512 = vmax.f32 %v468, 0.0
      %v513 = vmax.f32 %v471, 0.0
      %v514 = vmax.f32 %v476, 0.0
      %v515 = vmax.f32 %v479, 0.0
      %v516 = vmax.f32 %v484, 0.0
      %v517 = vmax.f32 %v487, 0.0
      %v518 = vmax.f32 %v492, 0.0
      %v519 = vmax.f32 %v495, 0.0
      %v520 = vmax.f32 %v500, 0.0
      %v521 = vmax.f32 %v503, 0.0
      %522 = vst [vmem:[%s175] sm:$0xff] %v506
      %523 = vst [vmem:[%s175 + $0x8] sm:$0xff] %v507
      %524 = vst [vmem:[%s175 + $0x10] sm:$0xff] %v508
      %525 = vst [vmem:[%s175 + $0x18] sm:$0xff] %v509
      %526 = vst [vmem:[%s175 + $0x20] sm:$0xff] %v510
      %527 = vst [vmem:[%s175 + $0x28] sm:$0xff] %v511
      %528 = vst [vmem:[%s175 + $0x30] sm:$0xff] %v512
      %529 = vst [vmem:[%s175 + $0x38] sm:$0xff] %v513
      %530 = vst [vmem:[%s175 + $0x40] sm:$0xff] %v514
      %531 = vst [vmem:[%s175 + $0x48] sm:$0xff] %v515
      %532 = vst [vmem:[%s175 + $0x50] sm:$0xff] %v516
      %533 = vst [vmem:[%s175 + $0x58] sm:$0xff] %v517
      %534 = vst [vmem:[%s175 + $0x60] sm:$0xff] %v518
      %535 = vst [vmem:[%s175 + $0x68] sm:$0xff] %v519
      %536 = vst [vmem:[%s175 + $0x70] sm:$0xff] %v520
      %537 = vst [vmem:[%s175 + $0x78] sm:$0xff] %v521
      %s538 = smul.u32 16, %s14
      %p539 = scmp.lt.s32.totalorder %s538, 47
      %s540 = scalar_select %p539, %s538, 47
      %s541 = smul.addr %s540, 8
      %s542 = scalar_lea.vmem %s3, %s541
      // Predicated region
      $region33: #{network_forward.3} parent=31 // pred_check
        %p543 = pneg %p100
      $region34: #{network_forward.3} parent=31 // pred_check_branch
        %545 = sbr.rel (%p543) target = $region36
      $region35: #{network_forward.3} parent=31 // pred_region
        %s546 = smul.u32 16, %s14
      $region36: #{network_forward.3} parent=31 // pred_fallthru
        _
    $region32: #{network_forward.3} parent=5 // pred_fallthru
      _
    %p547 = scmp.le.s32.totalorder 2, %s9
    // Predicated region
    $region37: #{network_forward.3} parent=5 // pred_check
      %p548 = pneg %p547
    $region38: #{network_forward.3} parent=5 // pred_check_branch
      %550 = sbr.rel (%p548) target = $region40
    $region39: #{network_forward.3} parent=5 // pred_region
      %s551 = ssub.s32 %s9, 2
      // Predicated region
      $region41: #{network_forward.3} parent=39 // pred_check
        %p552 = pneg %p106
      $region42: #{network_forward.3} parent=39 // pred_check_branch
        %554 = sbr.rel (%p552) target = $region44
      $region43: #{network_forward.3} parent=39 // pred_region
        %s555 = smul.u32 16, %s15
        %p556 = scmp.lt.s32.totalorder %s555, 47
        %s557 = scalar_select %p556, %s555, 47
        %s558 = smul.addr %s557, 8
        %s559 = scalar_lea.vmem %s3, %s558
      $region44: #{network_forward.3} parent=39 // pred_fallthru
        _
    $region40: #{network_forward.3} parent=5 // pred_fallthru
      _
  $region6: #{network_forward.3} parent=0 // loop_footer
    %s13 = sadd.s32 1, %s9
  $region7: #{network_forward.3} parent=0 // loop_footer_branch
    %8 = sbr.rel target = $region3
  $region8: #{network_forward.3} parent=0 // loop_exit
    _

</llo_original>
